<compile_context>
chip_gen: v6e
topology: v6e:2x2x1
jax: 0.10.0
libtpu: 0.0.40
codegen_flags: <defaults>
</compile_context>

<pallas_src>
import math

import jax
import jax.numpy as jnp
from jax import lax
from jax.experimental import pallas as pl
from jax.experimental.pallas import tpu as pltpu


def _round_up(a: int, b: int) -> int:
    return -(-a // b) * b


# VMEM-safe caps on the per-block packed-row count (intermediates cost ~16 KB / row).
_MAX_BLOCK_ROWS_SINGLE_TC = 1024   # v5e/v6e: 128 MiB physical VMEM, 32 MiB default scoped
_MAX_BLOCK_ROWS_DUAL_TC = 512      # v7x: 64 MiB physical VMEM per TC


def _num_tensorcores() -> int:
    """v7x has 2 TensorCores per chip; v5e/v6e have 1. Heuristic, overridable via num_cores."""
    try:
        kind = (jax.devices()[0].device_kind or "").lower()
    except Exception:
        return 1
    return 2 if "v7" in kind else 1


def build_pe_table(d_model: int, max_count: int = 210, row_align: int = 128,
                   dtype=jnp.float32) -> jnp.ndarray:
    """Sinusoidal table, identical math to the PyTorch __init__, zero-padded on rows.

    Rows [max_count, K) are zeros and unreachable by valid indices.  max_count=210
    pads to K=256 -> MXU/sublane aligned contraction dim, no edge masking.
    """
    position = jnp.arange(max_count, dtype=jnp.float32)[:, None]              # [max_count, 1]
    div_term = jnp.exp(
        jnp.arange(0, d_model, 2, dtype=jnp.float32) * (-math.log(10000.0) / d_model)
    )                                                                          # [d_model // 2]
    pe = jnp.zeros((max_count, d_model), dtype=jnp.float32)
    pe = pe.at[:, 0::2].set(jnp.sin(position * div_term))
    pe = pe.at[:, 1::2].set(jnp.cos(position * div_term))
    k_pad = _round_up(max_count, row_align)
    if k_pad != max_count:
        pe = jnp.pad(pe, ((0, k_pad - max_count), (0, 0)))
    return pe.astype(dtype)


def _block_diag_pe(pe: jnp.ndarray, pack: int) -> jnp.ndarray:
    """pe_bd[g*K + k, g*d : (g+1)*d] = pe[k, :]; zeros elsewhere.  (P*K, P*d)."""
    if pack == 1:
        return pe
    k, d = pe.shape
    bd = jnp.zeros((pack * k, pack * d), dtype=pe.dtype)
    for g in range(pack):
        bd = bd.at[g * k:(g + 1) * k, g * d:(g + 1) * d].set(pe)
    return bd


def _gather_packed_kernel(idx_ref, kiota_ref, pe_ref, out_ref):
    # idx_ref  : (P, block_rows) int32, lane-dense; idx[g, r] = atom index for slab g of row r.
    # kiota_ref: (P*K, block_rows) int32 constant (index_map -> (0,0)); kiota[g*K+k, r] = k.
    # pe_ref   : (P*K, P*d) block-diagonal pe, VMEM resident.
    # out_ref  : (block_rows, P*d) -- each 128-lane row holds P packed atom rows.
    p, b = idx_ref.shape
    pk = kiota_ref.shape[0]
    k = pk // p

    idx = idx_ref[...]                                                 # (P, B)
    kio = kiota_ref[...].reshape(p, k, b)                              # constant, no per-step iota build
    # onehot_t[g*K + kk, r] = (kk == idx[g, r]); pure VPU compare with sublane broadcast.
    onehot_t = (kio == idx[:, None, :]).astype(pe_ref.dtype).reshape(pk, b)

    # out_packed[r, g*d + dd] = pe[idx[g, r], dd] via block-diagonal pe.
    # Both operands contract over dim 0 -> single MXU matmul with N = P*d (=128) lanes.
    out_ref[...] = lax.dot_general(
        onehot_t,
        pe_ref[...],
        dimension_numbers=(((0,), (0,)), ((), ())),
        preferred_element_type=jnp.float32,
    ).astype(out_ref.dtype)


def positional_encoding_lookup(x: jnp.ndarray, pe: jnp.ndarray, pe_bd: jnp.ndarray,
                               pack: int, *, block_rows: int | None = None,
                               num_cores: int | None = None) -> jnp.ndarray:
    """Pallas equivalent of PositionalEncoding.forward: returns pe[x] -> [num_atoms, d_model]."""
    num_atoms = x.shape[0]
    k_rows, d_model = pe.shape
    x = x.astype(jnp.int32)

    p = pack
    n_rows_needed = max(pl.cdiv(num_atoms, p), 1)

    cores = num_cores if num_cores is not None else _num_tensorcores()
    cap = _MAX_BLOCK_ROWS_DUAL_TC if cores > 1 else _MAX_BLOCK_ROWS_SINGLE_TC
    if block_rows is None:
        if cores > 1:
            # Even split across TensorCores (v7x); lane-aligned index tiles.
            block_rows = _round_up(pl.cdiv(n_rows_needed, cores), 128)
        else:
            # Single TC (v5e/v6e): one big block kills per-grid-step overhead.
            block_rows = _round_up(n_rows_needed, 8)
        block_rows = min(block_rows, cap)

    if block_rows >= n_rows_needed:
        # Single block covering the whole (sublane-aligned) problem; block dims equal
        # the full array dims, so no (8, 128) divisibility constraint.
        n_rows = _round_up(n_rows_needed, 8)
        block_rows = n_rows
        grid = 1
    else:
        # Multi-block: index tiles are lane-dense, so block_rows must be 128-aligned.
        block_rows = _round_up(block_rows, 128)
        n_rows = _round_up(n_rows_needed, block_rows)
        grid = n_rows // block_rows
    n_pad = n_rows * p

    # Packed, lane-dense index layout: idx_packed[g, r] = x_padded[p*r + g].
    idx_flat = jnp.pad(x, (0, n_pad - num_atoms))          # pad value 0 selects pe[0]; stripped below
    idx_packed = idx_flat.reshape(n_rows, p).T             # (P, n_rows)

    # Constant k-iota, hoisted out of the kernel body: kiota[g*K + kk, r] = kk.
    kiota = jnp.broadcast_to(
        jnp.arange(k_rows, dtype=jnp.int32)[None, :, None], (p, k_rows, block_rows)
    ).reshape(p * k_rows, block_rows)

    out_packed = pl.pallas_call(
        _gather_packed_kernel,
        out_shape=jax.ShapeDtypeStruct((n_rows, p * d_model), pe_bd.dtype),
        grid=(grid,),
        in_specs=[
            pl.BlockSpec((p, block_rows), lambda i: (0, i)),              # per-tile packed indices
            pl.BlockSpec((p * k_rows, block_rows), lambda i: (0, 0)),     # constant iota, VMEM-resident
            pl.BlockSpec((p * k_rows, p * d_model), lambda i: (0, 0)),    # block-diagonal pe, resident
        ],
        out_specs=pl.BlockSpec((block_rows, p * d_model), lambda i: (i, 0)),
        compiler_params=pltpu.CompilerParams(dimension_semantics=("parallel",)),
    )(idx_packed, kiota, pe_bd)

    # Bit-identical row-major unpack back to [num_atoms, d_model].
    return out_packed.reshape(n_pad, d_model)[:num_atoms]


class PositionalEncoding:
    """JAX/Pallas port of the PyTorch module: __call__(x) == self.pe[x]."""

    def __init__(self, d_model: int, max_count: int = 210, dtype=jnp.float32):
        self.d_model = d_model
        self.max_count = max_count
        self.pe = build_pe_table(d_model, max_count, dtype=dtype)         # (K, d_model), row-padded
        # Pack factor: atom rows per 128-lane output slab (4 for d_model=32).
        self.pack = 128 // d_model if (d_model <= 128 and 128 % d_model == 0) else 1
        self.pe_bd = _block_diag_pe(self.pe, self.pack)                   # (P*K, P*d_model)

    def __call__(self, x: jnp.ndarray, *, block_rows: int | None = None,
                 num_cores: int | None = None, min_atoms_for_kernel: int = 0) -> jnp.ndarray:
        # Size gate: below ~1-2K atoms plain XLA gather can beat kernel launch + pad
        # overhead; production callers should set min_atoms_for_kernel after benchmarking.
        if x.shape[0] < min_atoms_for_kernel:
            return jnp.take(self.pe, x.astype(jnp.int32), axis=0)
        return positional_encoding_lookup(x, self.pe, self.pe_bd, self.pack,
                                          block_rows=block_rows, num_cores=num_cores)


if __name__ == "__main__":
    d_model = 32
    max_count = 210
    module = PositionalEncoding(d_model, max_count)       # pe: (256, 32) f32, rows >= 210 zero

    key = jax.random.PRNGKey(0)
    k1, k2, k3 = jax.random.split(key, 3)

    # Small case: single packed block (grid = 1), 16 atoms -> 8 packed rows.
    x1 = jax.random.randint(k1, (16,), 0, max_count, dtype=jnp.int32)
    out1 = jax.block_until_ready(module(x1))
    ref1 = jnp.take(module.pe, x1, axis=0)
    assert out1.shape == (16, d_model)
    assert jnp.allclose(out1, ref1, atol=1e-6), "mismatch vs reference gather (small case)"

    # Medium case: auto block selection (grid=1 on single-TC chips, 2-way split on v7x).
    x2 = jax.random.randint(k2, (600,), 0, max_count, dtype=jnp.int32)
    out2 = jax.block_until_ready(module(x2))
    ref2 = jnp.take(module.pe, x2, axis=0)
    assert out2.shape == (600, d_model)
    assert jnp.allclose(out2, ref2, atol=1e-6), "mismatch vs reference gather (medium case)"

    # Forced multi-block path: 128-row lane-aligned tiles -> grid > 1, pad + strip.
    x3 = jax.random.randint(k3, (1000,), 0, max_count, dtype=jnp.int32)
    out3 = jax.block_until_ready(module(x3, block_rows=128))
    ref3 = jnp.take(module.pe, x3, axis=0)
    assert out3.shape == (1000, d_model)
    assert jnp.allclose(out3, ref3, atol=1e-6), "mismatch vs reference gather (multi-block case)"

    print("KERNEL_OK")
</pallas_src>

<mosaic_0001>
module attributes {stable_mosaic.version = 11 : i64} {
  func.func @_gather_packed_kernel(%arg0: i32, %arg1: memref<4x8xi32, #tpu.memory_space<vmem>>, %arg2: memref<1024x8xi32, #tpu.memory_space<vmem>>, %arg3: memref<1024x128xf32, #tpu.memory_space<vmem>>, %arg4: memref<8x128xf32, #tpu.memory_space<vmem>>) attributes {dimension_semantics = [#tpu.dimension_semantics<parallel>], iteration_bounds = array<i64: 1>, scalar_prefetch = 0 : i64, scratch_operands = 0 : i64, tpu.core_type = #tpu.core_type<tc>, window_params = [{transform_indices = @transform_0, window_bounds = array<i64: 4, 8>}, {pipeline_mode = #tpu.pipeline_mode<synchronous>, transform_indices = @transform_1, window_bounds = array<i64: 1024, 8>}, {pipeline_mode = #tpu.pipeline_mode<synchronous>, transform_indices = @transform_2, window_bounds = array<i64: 1024, 128>}, {transform_indices = @transform_3, window_bounds = array<i64: 8, 128>}]} {
    %c0 = arith.constant 0 : index
    %c0_0 = arith.constant 0 : index
    %0 = vector.load %arg1[%c0, %c0_0] : memref<4x8xi32, #tpu.memory_space<vmem>>, vector<4x8xi32>
    %c0_1 = arith.constant 0 : index
    %c0_2 = arith.constant 0 : index
    %1 = vector.load %arg2[%c0_1, %c0_2] : memref<1024x8xi32, #tpu.memory_space<vmem>>, vector<1024x8xi32>
    %2 = vector.shape_cast %1 : vector<1024x8xi32> to vector<4x256x8xi32>
    %3 = vector.shape_cast %0 : vector<4x8xi32> to vector<4x1x8xi32>
    %4 = vector.broadcast %3 : vector<4x1x8xi32> to vector<4x256x8xi32>
    %5 = arith.cmpi eq, %2, %4 : vector<4x256x8xi32>
    %6 = arith.extui %5 : vector<4x256x8xi1> to vector<4x256x8xi32>
    %7 = arith.sitofp %6 : vector<4x256x8xi32> to vector<4x256x8xf32>
    %8 = vector.shape_cast %7 : vector<4x256x8xf32> to vector<1024x8xf32>
    %c0_3 = arith.constant 0 : index
    %c0_4 = arith.constant 0 : index
    %9 = vector.load %arg3[%c0_3, %c0_4] : memref<1024x128xf32, #tpu.memory_space<vmem>>, vector<1024x128xf32>
    %cst = arith.constant dense<0.000000e+00> : vector<8x128xf32>
    %10 = tpu.matmul %8, %9, %cst {dimension_numbers = #tpu.dot_dimension_numbers<[0], [0], [1], [1], [0, 1, 1, 1], [], []>} : vector<1024x8xf32>, vector<1024x128xf32>, vector<8x128xf32> -> vector<8x128xf32>
    %c0_5 = arith.constant 0 : index
    %c0_6 = arith.constant 0 : index
    %11 = vector.load %arg4[%c0_5, %c0_6] : memref<8x128xf32, #tpu.memory_space<vmem>>, vector<8x128xf32>
    tpu.vector_store %arg4[%c0_5, %c0_6], %10 {strides = array<i32>} : memref<8x128xf32, #tpu.memory_space<vmem>>, vector<8x128xf32>,
    return
  }
  func.func @transform_0(%arg0: i32) -> (i32, i32) {
    %c0_i32 = arith.constant 0 : i32
    %c0_i32_0 = arith.constant 0 : i32
    return %c0_i32, %arg0 : i32, i32
  }
  func.func @transform_1(%arg0: i32) -> (i32, i32) {
    %c0_i32 = arith.constant 0 : i32
    %c0_i32_0 = arith.constant 0 : i32
    %c0_i32_1 = arith.constant 0 : i32
    return %c0_i32, %c0_i32_0 : i32, i32
  }
  func.func @transform_2(%arg0: i32) -> (i32, i32) {
    %c0_i32 = arith.constant 0 : i32
    %c0_i32_0 = arith.constant 0 : i32
    %c0_i32_1 = arith.constant 0 : i32
    return %c0_i32, %c0_i32_0 : i32, i32
  }
  func.func @transform_3(%arg0: i32) -> (i32, i32) {
    %c0_i32 = arith.constant 0 : i32
    %c0_i32_0 = arith.constant 0 : i32
    return %arg0, %c0_i32 : i32, i32
  }
}

</mosaic_0001>

<llo_original>
// kernel: tpu_custom_call.1
$region0: #{tpu_custom_call.1}
  #allocation0 [shape = 'u32[]', space=smem, size = 0x4, offset = 0x4, fixed_abs, tag = 'smem constant byte address 0x4 - core index']
  #allocation1 [shape = 'u32[144,128]{1,0:T(1,128)}', space=vmem, size = 0x12000, scoped, tag = 'internal scratch']
  %s0 = inlined_call_operand.vmem [shape: s32[4,8], index: 0, kind: input, shape index: {}]
  %s1 = inlined_call_operand.vmem [shape: s32[1024,8], index: 1, kind: input, shape index: {}]
  %s2 = inlined_call_operand.vmem [shape: f32[1024,128], index: 2, kind: input, shape index: {}]
  %s3 = inlined_call_operand.hbm [shape: f32[8,128], index: 3, kind: output, shape index: {}]
  %s4 = sld [smem:[#allocation0]]
  $region22: #{tpu_custom_call.1} parent=0
    _
  %s6 = ssub.s32 1, %s4
  %s7 = scalar_select 0, %s6, %s4
  $region1: #{tpu_custom_call.1} parent=0
    #allocation2 [shape = 'u8[4096]{0}', space=vmem, size = 0x1000, scoped, tag = 'output window, operand 0, single buffered']
    #allocation3 [shape = 's32[1]{0}', space=sflag, size = 0x4, scoped, tag = 'scoped memory for tpu_custom_call.1']
    %8 = vsyncpa [#allocation3], 0
    // Predicated region
    $region2: #{tpu_custom_call.1} parent=1 // pred_check
      _
    $region3: #{tpu_custom_call.1} parent=1 // pred_check_branch
      %10 = sbr.rel (0) target = $region5
    $region4: #{tpu_custom_call.1} parent=1 // pred_region
      _
    $region5: #{tpu_custom_call.1} parent=1 // pred_fallthru
      _
    // Predicated region
    $region6: #{tpu_custom_call.1} parent=1 // pred_check
      _
    $region7: #{tpu_custom_call.1} parent=1 // pred_check_branch
      %12 = sbr.rel (0) target = $region9
    $region8: #{tpu_custom_call.1} parent=1 // pred_region
      _
    $region9: #{tpu_custom_call.1} parent=1 // pred_fallthru
      _
    // Predicated region
    $region10: #{tpu_custom_call.1} parent=1 // pred_check
      _
    $region11: #{tpu_custom_call.1} parent=1 // pred_check_branch
      %14 = sbr.rel (0) target = $region13
    $region12: #{tpu_custom_call.1} parent=1 // pred_region
      _
    $region13: #{tpu_custom_call.1} parent=1 // pred_fallthru
      _
    %v15 = vld [vmem:[%s0] sm:$0xf]
    %v16 = vld [vmem:[%s1] sm:$0xff]
    %v17 = vld [vmem:[%s1 + $0x8] sm:$0xff]
    %v18 = vld [vmem:[%s1 + $0x10] sm:$0xff]
    %v19 = vld [vmem:[%s1 + $0x18] sm:$0xff]
    %v20 = vld [vmem:[%s1 + $0x20] sm:$0xff]
    %v21 = vld [vmem:[%s1 + $0x28] sm:$0xff]
    %v22 = vld [vmem:[%s1 + $0x30] sm:$0xff]
    %v23 = vld [vmem:[%s1 + $0x38] sm:$0xff]
    %v24 = vld [vmem:[%s1 + $0x40] sm:$0xff]
    %v25 = vld [vmem:[%s1 + $0x48] sm:$0xff]
    %v26 = vld [vmem:[%s1 + $0x50] sm:$0xff]
    %v27 = vld [vmem:[%s1 + $0x58] sm:$0xff]
    %v28 = vld [vmem:[%s1 + $0x60] sm:$0xff]
    %v29 = vld [vmem:[%s1 + $0x68] sm:$0xff]
    %v30 = vld [vmem:[%s1 + $0x70] sm:$0xff]
    %v31 = vld [vmem:[%s1 + $0x78] sm:$0xff]
    %v32 = vld [vmem:[%s1 + $0x80] sm:$0xff]
    %v33 = vld [vmem:[%s1 + $0x88] sm:$0xff]
    %v34 = vld [vmem:[%s1 + $0x90] sm:$0xff]
    %v35 = vld [vmem:[%s1 + $0x98] sm:$0xff]
    %v36 = vld [vmem:[%s1 + $0xa0] sm:$0xff]
    %v37 = vld [vmem:[%s1 + $0xa8] sm:$0xff]
    %v38 = vld [vmem:[%s1 + $0xb0] sm:$0xff]
    %v39 = vld [vmem:[%s1 + $0xb8] sm:$0xff]
    %v40 = vld [vmem:[%s1 + $0xc0] sm:$0xff]
    %v41 = vld [vmem:[%s1 + $0xc8] sm:$0xff]
    %v42 = vld [vmem:[%s1 + $0xd0] sm:$0xff]
    %v43 = vld [vmem:[%s1 + $0xd8] sm:$0xff]
    %v44 = vld [vmem:[%s1 + $0xe0] sm:$0xff]
    %v45 = vld [vmem:[%s1 + $0xe8] sm:$0xff]
    %v46 = vld [vmem:[%s1 + $0xf0] sm:$0xff]
    %v47 = vld [vmem:[%s1 + $0xf8] sm:$0xff]
    %v48 = vld [vmem:[%s1 + $0x100] sm:$0xff]
    %v49 = vld [vmem:[%s1 + $0x108] sm:$0xff]
    %v50 = vld [vmem:[%s1 + $0x110] sm:$0xff]
    %v51 = vld [vmem:[%s1 + $0x118] sm:$0xff]
    %v52 = vld [vmem:[%s1 + $0x120] sm:$0xff]
    %v53 = vld [vmem:[%s1 + $0x128] sm:$0xff]
    %v54 = vld [vmem:[%s1 + $0x130] sm:$0xff]
    %v55 = vld [vmem:[%s1 + $0x138] sm:$0xff]
    %v56 = vld [vmem:[%s1 + $0x140] sm:$0xff]
    %v57 = vld [vmem:[%s1 + $0x148] sm:$0xff]
    %v58 = vld [vmem:[%s1 + $0x150] sm:$0xff]
    %v59 = vld [vmem:[%s1 + $0x158] sm:$0xff]
    %v60 = vld [vmem:[%s1 + $0x160] sm:$0xff]
    %v61 = vld [vmem:[%s1 + $0x168] sm:$0xff]
    %v62 = vld [vmem:[%s1 + $0x170] sm:$0xff]
    %v63 = vld [vmem:[%s1 + $0x178] sm:$0xff]
    %v64 = vld [vmem:[%s1 + $0x180] sm:$0xff]
    %v65 = vld [vmem:[%s1 + $0x188] sm:$0xff]
    %v66 = vld [vmem:[%s1 + $0x190] sm:$0xff]
    %v67 = vld [vmem:[%s1 + $0x198] sm:$0xff]
    %v68 = vld [vmem:[%s1 + $0x1a0] sm:$0xff]
    %v69 = vld [vmem:[%s1 + $0x1a8] sm:$0xff]
    %v70 = vld [vmem:[%s1 + $0x1b0] sm:$0xff]
    %v71 = vld [vmem:[%s1 + $0x1b8] sm:$0xff]
    %v72 = vld [vmem:[%s1 + $0x1c0] sm:$0xff]
    %v73 = vld [vmem:[%s1 + $0x1c8] sm:$0xff]
    %v74 = vld [vmem:[%s1 + $0x1d0] sm:$0xff]
    %v75 = vld [vmem:[%s1 + $0x1d8] sm:$0xff]
    %v76 = vld [vmem:[%s1 + $0x1e0] sm:$0xff]
    %v77 = vld [vmem:[%s1 + $0x1e8] sm:$0xff]
    %v78 = vld [vmem:[%s1 + $0x1f0] sm:$0xff]
    %v79 = vld [vmem:[%s1 + $0x1f8] sm:$0xff]
    %v80 = vld [vmem:[%s1 + $0x200] sm:$0xff]
    %v81 = vld [vmem:[%s1 + $0x208] sm:$0xff]
    %v82 = vld [vmem:[%s1 + $0x210] sm:$0xff]
    %v83 = vld [vmem:[%s1 + $0x218] sm:$0xff]
    %v84 = vld [vmem:[%s1 + $0x220] sm:$0xff]
    %v85 = vld [vmem:[%s1 + $0x228] sm:$0xff]
    %v86 = vld [vmem:[%s1 + $0x230] sm:$0xff]
    %v87 = vld [vmem:[%s1 + $0x238] sm:$0xff]
    %v88 = vld [vmem:[%s1 + $0x240] sm:$0xff]
    %v89 = vld [vmem:[%s1 + $0x248] sm:$0xff]
    %v90 = vld [vmem:[%s1 + $0x250] sm:$0xff]
    %v91 = vld [vmem:[%s1 + $0x258] sm:$0xff]
    %v92 = vld [vmem:[%s1 + $0x260] sm:$0xff]
    %v93 = vld [vmem:[%s1 + $0x268] sm:$0xff]
    %v94 = vld [vmem:[%s1 + $0x270] sm:$0xff]
    %v95 = vld [vmem:[%s1 + $0x278] sm:$0xff]
    %v96 = vld [vmem:[%s1 + $0x280] sm:$0xff]
    %v97 = vld [vmem:[%s1 + $0x288] sm:$0xff]
    %v98 = vld [vmem:[%s1 + $0x290] sm:$0xff]
    %v99 = vld [vmem:[%s1 + $0x298] sm:$0xff]
    %v100 = vld [vmem:[%s1 + $0x2a0] sm:$0xff]
    %v101 = vld [vmem:[%s1 + $0x2a8] sm:$0xff]
    %v102 = vld [vmem:[%s1 + $0x2b0] sm:$0xff]
    %v103 = vld [vmem:[%s1 + $0x2b8] sm:$0xff]
    %v104 = vld [vmem:[%s1 + $0x2c0] sm:$0xff]
    %v105 = vld [vmem:[%s1 + $0x2c8] sm:$0xff]
    %v106 = vld [vmem:[%s1 + $0x2d0] sm:$0xff]
    %v107 = vld [vmem:[%s1 + $0x2d8] sm:$0xff]
    %v108 = vld [vmem:[%s1 + $0x2e0] sm:$0xff]
    %v109 = vld [vmem:[%s1 + $0x2e8] sm:$0xff]
    %v110 = vld [vmem:[%s1 + $0x2f0] sm:$0xff]
    %v111 = vld [vmem:[%s1 + $0x2f8] sm:$0xff]
    %v112 = vld [vmem:[%s1 + $0x300] sm:$0xff]
    %v113 = vld [vmem:[%s1 + $0x308] sm:$0xff]
    %v114 = vld [vmem:[%s1 + $0x310] sm:$0xff]
    %v115 = vld [vmem:[%s1 + $0x318] sm:$0xff]
    %v116 = vld [vmem:[%s1 + $0x320] sm:$0xff]
    %v117 = vld [vmem:[%s1 + $0x328] sm:$0xff]
    %v118 = vld [vmem:[%s1 + $0x330] sm:$0xff]
    %v119 = vld [vmem:[%s1 + $0x338] sm:$0xff]
    %v120 = vld [vmem:[%s1 + $0x340] sm:$0xff]
    %v121 = vld [vmem:[%s1 + $0x348] sm:$0xff]
    %v122 = vld [vmem:[%s1 + $0x350] sm:$0xff]
    %v123 = vld [vmem:[%s1 + $0x358] sm:$0xff]
    %v124 = vld [vmem:[%s1 + $0x360] sm:$0xff]
    %v125 = vld [vmem:[%s1 + $0x368] sm:$0xff]
    %v126 = vld [vmem:[%s1 + $0x370] sm:$0xff]
    %v127 = vld [vmem:[%s1 + $0x378] sm:$0xff]
    %v128 = vld [vmem:[%s1 + $0x380] sm:$0xff]
    %v129 = vld [vmem:[%s1 + $0x388] sm:$0xff]
    %v130 = vld [vmem:[%s1 + $0x390] sm:$0xff]
    %v131 = vld [vmem:[%s1 + $0x398] sm:$0xff]
    %v132 = vld [vmem:[%s1 + $0x3a0] sm:$0xff]
    %v133 = vld [vmem:[%s1 + $0x3a8] sm:$0xff]
    %v134 = vld [vmem:[%s1 + $0x3b0] sm:$0xff]
    %v135 = vld [vmem:[%s1 + $0x3b8] sm:$0xff]
    %v136 = vld [vmem:[%s1 + $0x3c0] sm:$0xff]
    %v137 = vld [vmem:[%s1 + $0x3c8] sm:$0xff]
    %v138 = vld [vmem:[%s1 + $0x3d0] sm:$0xff]
    %v139 = vld [vmem:[%s1 + $0x3d8] sm:$0xff]
    %v140 = vld [vmem:[%s1 + $0x3e0] sm:$0xff]
    %v141 = vld [vmem:[%s1 + $0x3e8] sm:$0xff]
    %v142 = vld [vmem:[%s1 + $0x3f0] sm:$0xff]
    %v143 = vld [vmem:[%s1 + $0x3f8] sm:$0xff]
    %v145 = vunpack.c.l.s4 1966171168
    %v146 = vunpack.c.0.s8 %v145
    %v147 = vlaneseq
    %v148 = vshrl.u32 %v147, 7
    %v149 = vsub.s32 %v146, %v148
    %v150 = vrot.slane %v15, %v149
    %v151 = vcombine.high %v150, %v150
    %v153 = vunpack.c.l.s4 1966171168
    %v154 = vunpack.c.0.s8 %v153
    %v155 = vlaneseq
    %v156 = vshrl.u32 %v155, 7
    %v157 = vsub.s32 %v154, %v156
    %v158 = vrot.slane %v150, %v157
    %v160 = vunpack.c.l.s4 1966171168
    %v161 = vunpack.c.0.s8 %v160
    %v162 = vlaneseq
    %v163 = vshrl.u32 %v162, 7
    %v164 = vsub.s32 %v161, %v163
    %v165 = vrot.slane %v151, %v164
    %v166 = vcombine.high %v158, %v158
    %v167 = vcombine.high %v165, %v165
    %v168 = vlaneseq
    %v169 = vshrl.u32 %v168, 7
    %v170 = vsub.s32 0, %v169
    %v171 = vrot.slane %v158, %v170
    %v172 = vlaneseq
    %v173 = vshrl.u32 %v172, 7
    %v174 = vsub.s32 0, %v173
    %v175 = vrot.slane %v165, %v174
    %v176 = vlaneseq
    %v177 = vshrl.u32 %v176, 7
    %v178 = vsub.s32 0, %v177
    %v179 = vrot.slane %v166, %v178
    %v180 = vlaneseq
    %v181 = vshrl.u32 %v180, 7
    %v182 = vsub.s32 0, %v181
    %v183 = vrot.slane %v167, %v182
    %vm184 = vcmp.eq.s32.totalorder %v16, %v171
    %vm185 = vcmp.eq.s32.totalorder %v17, %v171
    %vm186 = vcmp.eq.s32.totalorder %v18, %v171
    %vm187 = vcmp.eq.s32.totalorder %v19, %v171
    %vm188 = vcmp.eq.s32.totalorder %v20, %v171
    %vm189 = vcmp.eq.s32.totalorder %v21, %v171
    %vm190 = vcmp.eq.s32.totalorder %v22, %v171
    %vm191 = vcmp.eq.s32.totalorder %v23, %v171
    %vm192 = vcmp.eq.s32.totalorder %v24, %v171
    %vm193 = vcmp.eq.s32.totalorder %v25, %v171
    %vm194 = vcmp.eq.s32.totalorder %v26, %v171
    %vm195 = vcmp.eq.s32.totalorder %v27, %v171
    %vm196 = vcmp.eq.s32.totalorder %v28, %v171
    %vm197 = vcmp.eq.s32.totalorder %v29, %v171
    %vm198 = vcmp.eq.s32.totalorder %v30, %v171
    %vm199 = vcmp.eq.s32.totalorder %v31, %v171
    %vm200 = vcmp.eq.s32.totalorder %v32, %v171
    %vm201 = vcmp.eq.s32.totalorder %v33, %v171
    %vm202 = vcmp.eq.s32.totalorder %v34, %v171
    %vm203 = vcmp.eq.s32.totalorder %v35, %v171
    %vm204 = vcmp.eq.s32.totalorder %v36, %v171
    %vm205 = vcmp.eq.s32.totalorder %v37, %v171
    %vm206 = vcmp.eq.s32.totalorder %v38, %v171
    %vm207 = vcmp.eq.s32.totalorder %v39, %v171
    %vm208 = vcmp.eq.s32.totalorder %v40, %v171
    %vm209 = vcmp.eq.s32.totalorder %v41, %v171
    %vm210 = vcmp.eq.s32.totalorder %v42, %v171
    %vm211 = vcmp.eq.s32.totalorder %v43, %v171
    %vm212 = vcmp.eq.s32.totalorder %v44, %v171
    %vm213 = vcmp.eq.s32.totalorder %v45, %v171
    %vm214 = vcmp.eq.s32.totalorder %v46, %v171
    %vm215 = vcmp.eq.s32.totalorder %v47, %v171
    %vm216 = vcmp.eq.s32.totalorder %v48, %v175
    %vm217 = vcmp.eq.s32.totalorder %v49, %v175
    %vm218 = vcmp.eq.s32.totalorder %v50, %v175
    %vm219 = vcmp.eq.s32.totalorder %v51, %v175
    %vm220 = vcmp.eq.s32.totalorder %v52, %v175
    %vm221 = vcmp.eq.s32.totalorder %v53, %v175
    %vm222 = vcmp.eq.s32.totalorder %v54, %v175
    %vm223 = vcmp.eq.s32.totalorder %v55, %v175
    %vm224 = vcmp.eq.s32.totalorder %v56, %v175
    %vm225 = vcmp.eq.s32.totalorder %v57, %v175
    %vm226 = vcmp.eq.s32.totalorder %v58, %v175
    %vm227 = vcmp.eq.s32.totalorder %v59, %v175
    %vm228 = vcmp.eq.s32.totalorder %v60, %v175
    %vm229 = vcmp.eq.s32.totalorder %v61, %v175
    %vm230 = vcmp.eq.s32.totalorder %v62, %v175
    %vm231 = vcmp.eq.s32.totalorder %v63, %v175
    %vm232 = vcmp.eq.s32.totalorder %v64, %v175
    %vm233 = vcmp.eq.s32.totalorder %v65, %v175
    %vm234 = vcmp.eq.s32.totalorder %v66, %v175
    %vm235 = vcmp.eq.s32.totalorder %v67, %v175
    %vm236 = vcmp.eq.s32.totalorder %v68, %v175
    %vm237 = vcmp.eq.s32.totalorder %v69, %v175
    %vm238 = vcmp.eq.s32.totalorder %v70, %v175
    %vm239 = vcmp.eq.s32.totalorder %v71, %v175
    %vm240 = vcmp.eq.s32.totalorder %v72, %v175
    %vm241 = vcmp.eq.s32.totalorder %v73, %v175
    %vm242 = vcmp.eq.s32.totalorder %v74, %v175
    %vm243 = vcmp.eq.s32.totalorder %v75, %v175
    %vm244 = vcmp.eq.s32.totalorder %v76, %v175
    %vm245 = vcmp.eq.s32.totalorder %v77, %v175
    %vm246 = vcmp.eq.s32.totalorder %v78, %v175
    %vm247 = vcmp.eq.s32.totalorder %v79, %v175
    %vm248 = vcmp.eq.s32.totalorder %v80, %v179
    %vm249 = vcmp.eq.s32.totalorder %v81, %v179
    %vm250 = vcmp.eq.s32.totalorder %v82, %v179
    %vm251 = vcmp.eq.s32.totalorder %v83, %v179
    %vm252 = vcmp.eq.s32.totalorder %v84, %v179
    %vm253 = vcmp.eq.s32.totalorder %v85, %v179
    %vm254 = vcmp.eq.s32.totalorder %v86, %v179
    %vm255 = vcmp.eq.s32.totalorder %v87, %v179
    %vm256 = vcmp.eq.s32.totalorder %v88, %v179
    %vm257 = vcmp.eq.s32.totalorder %v89, %v179
    %vm258 = vcmp.eq.s32.totalorder %v90, %v179
    %vm259 = vcmp.eq.s32.totalorder %v91, %v179
    %vm260 = vcmp.eq.s32.totalorder %v92, %v179
    %vm261 = vcmp.eq.s32.totalorder %v93, %v179
    %vm262 = vcmp.eq.s32.totalorder %v94, %v179
    %vm263 = vcmp.eq.s32.totalorder %v95, %v179
    %vm264 = vcmp.eq.s32.totalorder %v96, %v179
    %vm265 = vcmp.eq.s32.totalorder %v97, %v179
    %vm266 = vcmp.eq.s32.totalorder %v98, %v179
    %vm267 = vcmp.eq.s32.totalorder %v99, %v179
    %vm268 = vcmp.eq.s32.totalorder %v100, %v179
    %vm269 = vcmp.eq.s32.totalorder %v101, %v179
    %vm270 = vcmp.eq.s32.totalorder %v102, %v179
    %vm271 = vcmp.eq.s32.totalorder %v103, %v179
    %vm272 = vcmp.eq.s32.totalorder %v104, %v179
    %vm273 = vcmp.eq.s32.totalorder %v105, %v179
    %vm274 = vcmp.eq.s32.totalorder %v106, %v179
    %vm275 = vcmp.eq.s32.totalorder %v107, %v179
    %vm276 = vcmp.eq.s32.totalorder %v108, %v179
    %vm277 = vcmp.eq.s32.totalorder %v109, %v179
    %vm278 = vcmp.eq.s32.totalorder %v110, %v179
    %vm279 = vcmp.eq.s32.totalorder %v111, %v179
    %vm280 = vcmp.eq.s32.totalorder %v112, %v183
    %vm281 = vcmp.eq.s32.totalorder %v113, %v183
    %vm282 = vcmp.eq.s32.totalorder %v114, %v183
    %vm283 = vcmp.eq.s32.totalorder %v115, %v183
    %vm284 = vcmp.eq.s32.totalorder %v116, %v183
    %vm285 = vcmp.eq.s32.totalorder %v117, %v183
    %vm286 = vcmp.eq.s32.totalorder %v118, %v183
    %vm287 = vcmp.eq.s32.totalorder %v119, %v183
    %vm288 = vcmp.eq.s32.totalorder %v120, %v183
    %vm289 = vcmp.eq.s32.totalorder %v121, %v183
    %vm290 = vcmp.eq.s32.totalorder %v122, %v183
    %vm291 = vcmp.eq.s32.totalorder %v123, %v183
    %vm292 = vcmp.eq.s32.totalorder %v124, %v183
    %vm293 = vcmp.eq.s32.totalorder %v125, %v183
    %vm294 = vcmp.eq.s32.totalorder %v126, %v183
    %vm295 = vcmp.eq.s32.totalorder %v127, %v183
    %vm296 = vcmp.eq.s32.totalorder %v128, %v183
    %vm297 = vcmp.eq.s32.totalorder %v129, %v183
    %vm298 = vcmp.eq.s32.totalorder %v130, %v183
    %vm299 = vcmp.eq.s32.totalorder %v131, %v183
    %vm300 = vcmp.eq.s32.totalorder %v132, %v183
    %vm301 = vcmp.eq.s32.totalorder %v133, %v183
    %vm302 = vcmp.eq.s32.totalorder %v134, %v183
    %vm303 = vcmp.eq.s32.totalorder %v135, %v183
    %vm304 = vcmp.eq.s32.totalorder %v136, %v183
    %vm305 = vcmp.eq.s32.totalorder %v137, %v183
    %vm306 = vcmp.eq.s32.totalorder %v138, %v183
    %vm307 = vcmp.eq.s32.totalorder %v139, %v183
    %vm308 = vcmp.eq.s32.totalorder %v140, %v183
    %vm309 = vcmp.eq.s32.totalorder %v141, %v183
    %vm310 = vcmp.eq.s32.totalorder %v142, %v183
    %vm311 = vcmp.eq.s32.totalorder %v143, %v183
    %v312 = vsel %vm184, 1, 0
    %v313 = vsel %vm185, 1, 0
    %v314 = vsel %vm186, 1, 0
    %v315 = vsel %vm187, 1, 0
    %v316 = vsel %vm188, 1, 0
    %v317 = vsel %vm189, 1, 0
    %v318 = vsel %vm190, 1, 0
    %v319 = vsel %vm191, 1, 0
    %v320 = vsel %vm192, 1, 0
    %v321 = vsel %vm193, 1, 0
    %v322 = vsel %vm194, 1, 0
    %v323 = vsel %vm195, 1, 0
    %v324 = vsel %vm196, 1, 0
    %v325 = vsel %vm197, 1, 0
    %v326 = vsel %vm198, 1, 0
    %v327 = vsel %vm199, 1, 0
    %v328 = vsel %vm200, 1, 0
    %v329 = vsel %vm201, 1, 0
    %v330 = vsel %vm202, 1, 0
    %v331 = vsel %vm203, 1, 0
    %v332 = vsel %vm204, 1, 0
    %v333 = vsel %vm205, 1, 0
    %v334 = vsel %vm206, 1, 0
    %v335 = vsel %vm207, 1, 0
    %v336 = vsel %vm208, 1, 0
    %v337 = vsel %vm209, 1, 0
    %v338 = vsel %vm210, 1, 0
    %v339 = vsel %vm211, 1, 0
    %v340 = vsel %vm212, 1, 0
    %v341 = vsel %vm213, 1, 0
    %v342 = vsel %vm214, 1, 0
    %v343 = vsel %vm215, 1, 0
    %v344 = vsel %vm216, 1, 0
    %v345 = vsel %vm217, 1, 0
    %v346 = vsel %vm218, 1, 0
    %v347 = vsel %vm219, 1, 0
    %v348 = vsel %vm220, 1, 0
    %v349 = vsel %vm221, 1, 0
    %v350 = vsel %vm222, 1, 0
    %v351 = vsel %vm223, 1, 0
    %v352 = vsel %vm224, 1, 0
    %v353 = vsel %vm225, 1, 0
    %v354 = vsel %vm226, 1, 0
    %v355 = vsel %vm227, 1, 0
    %v356 = vsel %vm228, 1, 0
    %v357 = vsel %vm229, 1, 0
    %v358 = vsel %vm230, 1, 0
    %v359 = vsel %vm231, 1, 0
    %v360 = vsel %vm232, 1, 0
    %v361 = vsel %vm233, 1, 0
    %v362 = vsel %vm234, 1, 0
    %v363 = vsel %vm235, 1, 0
    %v364 = vsel %vm236, 1, 0
    %v365 = vsel %vm237, 1, 0
    %v366 = vsel %vm238, 1, 0
    %v367 = vsel %vm239, 1, 0
    %v368 = vsel %vm240, 1, 0
    %v369 = vsel %vm241, 1, 0
    %v370 = vsel %vm242, 1, 0
    %v371 = vsel %vm243, 1, 0
    %v372 = vsel %vm244, 1, 0
    %v373 = vsel %vm245, 1, 0
    %v374 = vsel %vm246, 1, 0
    %v375 = vsel %vm247, 1, 0
    %v376 = vsel %vm248, 1, 0
    %v377 = vsel %vm249, 1, 0
    %v378 = vsel %vm250, 1, 0
    %v379 = vsel %vm251, 1, 0
    %v380 = vsel %vm252, 1, 0
    %v381 = vsel %vm253, 1, 0
    %v382 = vsel %vm254, 1, 0
    %v383 = vsel %vm255, 1, 0
    %v384 = vsel %vm256, 1, 0
    %v385 = vsel %vm257, 1, 0
    %v386 = vsel %vm258, 1, 0
    %v387 = vsel %vm259, 1, 0
    %v388 = vsel %vm260, 1, 0
    %v389 = vsel %vm261, 1, 0
    %v390 = vsel %vm262, 1, 0
    %v391 = vsel %vm263, 1, 0
    %v392 = vsel %vm264, 1, 0
    %v393 = vsel %vm265, 1, 0
    %v394 = vsel %vm266, 1, 0
    %v395 = vsel %vm267, 1, 0
    %v396 = vsel %vm268, 1, 0
    %v397 = vsel %vm269, 1, 0
    %v398 = vsel %vm270, 1, 0
    %v399 = vsel %vm271, 1, 0
    %v400 = vsel %vm272, 1, 0
    %v401 = vsel %vm273, 1, 0
    %v402 = vsel %vm274, 1, 0
    %v403 = vsel %vm275, 1, 0
    %v404 = vsel %vm276, 1, 0
    %v405 = vsel %vm277, 1, 0
    %v406 = vsel %vm278, 1, 0
    %v407 = vsel %vm279, 1, 0
    %v408 = vsel %vm280, 1, 0
    %v409 = vsel %vm281, 1, 0
    %v410 = vsel %vm282, 1, 0
    %v411 = vsel %vm283, 1, 0
    %v412 = vsel %vm284, 1, 0
    %v413 = vsel %vm285, 1, 0
    %v414 = vsel %vm286, 1, 0
    %v415 = vsel %vm287, 1, 0
    %v416 = vsel %vm288, 1, 0
    %v417 = vsel %vm289, 1, 0
    %v418 = vsel %vm290, 1, 0
    %v419 = vsel %vm291, 1, 0
    %v420 = vsel %vm292, 1, 0
    %v421 = vsel %vm293, 1, 0
    %v422 = vsel %vm294, 1, 0
    %v423 = vsel %vm295, 1, 0
    %v424 = vsel %vm296, 1, 0
    %v425 = vsel %vm297, 1, 0
    %v426 = vsel %vm298, 1, 0
    %v427 = vsel %vm299, 1, 0
    %v428 = vsel %vm300, 1, 0
    %v429 = vsel %vm301, 1, 0
    %v430 = vsel %vm302, 1, 0
    %v431 = vsel %vm303, 1, 0
    %v432 = vsel %vm304, 1, 0
    %v433 = vsel %vm305, 1, 0
    %v434 = vsel %vm306, 1, 0
    %v435 = vsel %vm307, 1, 0
    %v436 = vsel %vm308, 1, 0
    %v437 = vsel %vm309, 1, 0
    %v438 = vsel %vm310, 1, 0
    %v439 = vsel %vm311, 1, 0
    %v440 = vcvt.s32.f32 %v312
    %v441 = vcvt.s32.f32 %v313
    %v442 = vcvt.s32.f32 %v314
    %v443 = vcvt.s32.f32 %v315
    %v444 = vcvt.s32.f32 %v316
    %v445 = vcvt.s32.f32 %v317
    %v446 = vcvt.s32.f32 %v318
    %v447 = vcvt.s32.f32 %v319
    %v448 = vcvt.s32.f32 %v320
    %v449 = vcvt.s32.f32 %v321
    %v450 = vcvt.s32.f32 %v322
    %v451 = vcvt.s32.f32 %v323
    %v452 = vcvt.s32.f32 %v324
    %v453 = vcvt.s32.f32 %v325
    %v454 = vcvt.s32.f32 %v326
    %v455 = vcvt.s32.f32 %v327
    %v456 = vcvt.s32.f32 %v328
    %v457 = vcvt.s32.f32 %v329
    %v458 = vcvt.s32.f32 %v330
    %v459 = vcvt.s32.f32 %v331
    %v460 = vcvt.s32.f32 %v332
    %v461 = vcvt.s32.f32 %v333
    %v462 = vcvt.s32.f32 %v334
    %v463 = vcvt.s32.f32 %v335
    %v464 = vcvt.s32.f32 %v336
    %v465 = vcvt.s32.f32 %v337
    %v466 = vcvt.s32.f32 %v338
    %v467 = vcvt.s32.f32 %v339
    %v468 = vcvt.s32.f32 %v340
    %v469 = vcvt.s32.f32 %v341
    %v470 = vcvt.s32.f32 %v342
    %v471 = vcvt.s32.f32 %v343
    %v472 = vcvt.s32.f32 %v344
    %v473 = vcvt.s32.f32 %v345
    %v474 = vcvt.s32.f32 %v346
    %v475 = vcvt.s32.f32 %v347
    %v476 = vcvt.s32.f32 %v348
    %v477 = vcvt.s32.f32 %v349
    %v478 = vcvt.s32.f32 %v350
    %v479 = vcvt.s32.f32 %v351
    %v480 = vcvt.s32.f32 %v352
    %v481 = vcvt.s32.f32 %v353
    %v482 = vcvt.s32.f32 %v354
    %v483 = vcvt.s32.f32 %v355
    %v484 = vcvt.s32.f32 %v356
    %v485 = vcvt.s32.f32 %v357
    %v486 = vcvt.s32.f32 %v358
    %v487 = vcvt.s32.f32 %v359
    %v488 = vcvt.s32.f32 %v360
    %v489 = vcvt.s32.f32 %v361
    %v490 = vcvt.s32.f32 %v362
    %v491 = vcvt.s32.f32 %v363
    %v492 = vcvt.s32.f32 %v364
    %v493 = vcvt.s32.f32 %v365
    %v494 = vcvt.s32.f32 %v366
    %v495 = vcvt.s32.f32 %v367
    %v496 = vcvt.s32.f32 %v368
    %v497 = vcvt.s32.f32 %v369
    %v498 = vcvt.s32.f32 %v370
    %v499 = vcvt.s32.f32 %v371
    %v500 = vcvt.s32.f32 %v372
    %v501 = vcvt.s32.f32 %v373
    %v502 = vcvt.s32.f32 %v374
    %v503 = vcvt.s32.f32 %v375
    %v504 = vcvt.s32.f32 %v376
    %v505 = vcvt.s32.f32 %v377
    %v506 = vcvt.s32.f32 %v378
    %v507 = vcvt.s32.f32 %v379
    %v508 = vcvt.s32.f32 %v380
    %v509 = vcvt.s32.f32 %v381
    %v510 = vcvt.s32.f32 %v382
    %v511 = vcvt.s32.f32 %v383
    %v512 = vcvt.s32.f32 %v384
    %v513 = vcvt.s32.f32 %v385
    %v514 = vcvt.s32.f32 %v386
    %v515 = vcvt.s32.f32 %v387
    %v516 = vcvt.s32.f32 %v388
    %v517 = vcvt.s32.f32 %v389
    %v518 = vcvt.s32.f32 %v390
    %v519 = vcvt.s32.f32 %v391
    %v520 = vcvt.s32.f32 %v392
    %v521 = vcvt.s32.f32 %v393
    %v522 = vcvt.s32.f32 %v394
    %v523 = vcvt.s32.f32 %v395
    %v524 = vcvt.s32.f32 %v396
    %v525 = vcvt.s32.f32 %v397
    %v526 = vcvt.s32.f32 %v398
    %v527 = vcvt.s32.f32 %v399
    %v528 = vcvt.s32.f32 %v400
    %v529 = vcvt.s32.f32 %v401
    %v530 = vcvt.s32.f32 %v402
    %v531 = vcvt.s32.f32 %v403
    %v532 = vcvt.s32.f32 %v404
    %v533 = vcvt.s32.f32 %v405
    %v534 = vcvt.s32.f32 %v406
    %v535 = vcvt.s32.f32 %v407
    %v536 = vcvt.s32.f32 %v408
    %v537 = vcvt.s32.f32 %v409
    %v538 = vcvt.s32.f32 %v410
    %v539 = vcvt.s32.f32 %v411
    %v540 = vcvt.s32.f32 %v412
    %v541 = vcvt.s32.f32 %v413
    %v542 = vcvt.s32.f32 %v414
    %v543 = vcvt.s32.f32 %v415
    %v544 = vcvt.s32.f32 %v416
    %v545 = vcvt.s32.f32 %v417
    %v546 = vcvt.s32.f32 %v418
    %v547 = vcvt.s32.f32 %v419
    %v548 = vcvt.s32.f32 %v420
    %v549 = vcvt.s32.f32 %v421
    %v550 = vcvt.s32.f32 %v422
    %v551 = vcvt.s32.f32 %v423
    %v552 = vcvt.s32.f32 %v424
    %v553 = vcvt.s32.f32 %v425
    %v554 = vcvt.s32.f32 %v426
    %v555 = vcvt.s32.f32 %v427
    %v556 = vcvt.s32.f32 %v428
    %v557 = vcvt.s32.f32 %v429
    %v558 = vcvt.s32.f32 %v430
    %v559 = vcvt.s32.f32 %v431
    %v560 = vcvt.s32.f32 %v432
    %v561 = vcvt.s32.f32 %v433
    %v562 = vcvt.s32.f32 %v434
    %v563 = vcvt.s32.f32 %v435
    %v564 = vcvt.s32.f32 %v436
    %v565 = vcvt.s32.f32 %v437
    %v566 = vcvt.s32.f32 %v438
    %v567 = vcvt.s32.f32 %v439
    %v568 = vld [vmem:[%s2] sm:$0xff]
    %v569 = vld [vmem:[%s2 + $0x8] sm:$0xff]
    %v570 = vld [vmem:[%s2 + $0x10] sm:$0xff]
    %v571 = vld [vmem:[%s2 + $0x18] sm:$0xff]
    %v572 = vld [vmem:[%s2 + $0x20] sm:$0xff]
    %v573 = vld [vmem:[%s2 + $0x28] sm:$0xff]
    %v574 = vld [vmem:[%s2 + $0x30] sm:$0xff]
    %v575 = vld [vmem:[%s2 + $0x38] sm:$0xff]
    %v576 = vld [vmem:[%s2 + $0x40] sm:$0xff]
    %v577 = vld [vmem:[%s2 + $0x48] sm:$0xff]
    %v578 = vld [vmem:[%s2 + $0x50] sm:$0xff]
    %v579 = vld [vmem:[%s2 + $0x58] sm:$0xff]
    %v580 = vld [vmem:[%s2 + $0x60] sm:$0xff]
    %v581 = vld [vmem:[%s2 + $0x68] sm:$0xff]
    %v582 = vld [vmem:[%s2 + $0x70] sm:$0xff]
    %v583 = vld [vmem:[%s2 + $0x78] sm:$0xff]
    %v584 = vld [vmem:[%s2 + $0x80] sm:$0xff]
    %v585 = vld [vmem:[%s2 + $0x88] sm:$0xff]
    %v586 = vld [vmem:[%s2 + $0x90] sm:$0xff]
    %v587 = vld [vmem:[%s2 + $0x98] sm:$0xff]
    %v588 = vld [vmem:[%s2 + $0xa0] sm:$0xff]
    %v589 = vld [vmem:[%s2 + $0xa8] sm:$0xff]
    %v590 = vld [vmem:[%s2 + $0xb0] sm:$0xff]
    %v591 = vld [vmem:[%s2 + $0xb8] sm:$0xff]
    %v592 = vld [vmem:[%s2 + $0xc0] sm:$0xff]
    %v593 = vld [vmem:[%s2 + $0xc8] sm:$0xff]
    %v594 = vld [vmem:[%s2 + $0xd0] sm:$0xff]
    %v595 = vld [vmem:[%s2 + $0xd8] sm:$0xff]
    %v596 = vld [vmem:[%s2 + $0xe0] sm:$0xff]
    %v597 = vld [vmem:[%s2 + $0xe8] sm:$0xff]
    %v598 = vld [vmem:[%s2 + $0xf0] sm:$0xff]
    %v599 = vld [vmem:[%s2 + $0xf8] sm:$0xff]
    %v600 = vld [vmem:[%s2 + $0x100] sm:$0xff]
    %v601 = vld [vmem:[%s2 + $0x108] sm:$0xff]
    %v602 = vld [vmem:[%s2 + $0x110] sm:$0xff]
    %v603 = vld [vmem:[%s2 + $0x118] sm:$0xff]
    %v604 = vld [vmem:[%s2 + $0x120] sm:$0xff]
    %v605 = vld [vmem:[%s2 + $0x128] sm:$0xff]
    %v606 = vld [vmem:[%s2 + $0x130] sm:$0xff]
    %v607 = vld [vmem:[%s2 + $0x138] sm:$0xff]
    %v608 = vld [vmem:[%s2 + $0x140] sm:$0xff]
    %v609 = vld [vmem:[%s2 + $0x148] sm:$0xff]
    %v610 = vld [vmem:[%s2 + $0x150] sm:$0xff]
    %v611 = vld [vmem:[%s2 + $0x158] sm:$0xff]
    %v612 = vld [vmem:[%s2 + $0x160] sm:$0xff]
    %v613 = vld [vmem:[%s2 + $0x168] sm:$0xff]
    %v614 = vld [vmem:[%s2 + $0x170] sm:$0xff]
    %v615 = vld [vmem:[%s2 + $0x178] sm:$0xff]
    %v616 = vld [vmem:[%s2 + $0x180] sm:$0xff]
    %v617 = vld [vmem:[%s2 + $0x188] sm:$0xff]
    %v618 = vld [vmem:[%s2 + $0x190] sm:$0xff]
    %v619 = vld [vmem:[%s2 + $0x198] sm:$0xff]
    %v620 = vld [vmem:[%s2 + $0x1a0] sm:$0xff]
    %v621 = vld [vmem:[%s2 + $0x1a8] sm:$0xff]
    %v622 = vld [vmem:[%s2 + $0x1b0] sm:$0xff]
    %v623 = vld [vmem:[%s2 + $0x1b8] sm:$0xff]
    %v624 = vld [vmem:[%s2 + $0x1c0] sm:$0xff]
    %v625 = vld [vmem:[%s2 + $0x1c8] sm:$0xff]
    %v626 = vld [vmem:[%s2 + $0x1d0] sm:$0xff]
    %v627 = vld [vmem:[%s2 + $0x1d8] sm:$0xff]
    %v628 = vld [vmem:[%s2 + $0x1e0] sm:$0xff]
    %v629 = vld [vmem:[%s2 + $0x1e8] sm:$0xff]
    %v630 = vld [vmem:[%s2 + $0x1f0] sm:$0xff]
    %v631 = vld [vmem:[%s2 + $0x1f8] sm:$0xff]
    %v632 = vld [vmem:[%s2 + $0x200] sm:$0xff]
    %v633 = vld [vmem:[%s2 + $0x208] sm:$0xff]
    %v634 = vld [vmem:[%s2 + $0x210] sm:$0xff]
    %v635 = vld [vmem:[%s2 + $0x218] sm:$0xff]
    %v636 = vld [vmem:[%s2 + $0x220] sm:$0xff]
    %v637 = vld [vmem:[%s2 + $0x228] sm:$0xff]
    %v638 = vld [vmem:[%s2 + $0x230] sm:$0xff]
    %v639 = vld [vmem:[%s2 + $0x238] sm:$0xff]
    %v640 = vld [vmem:[%s2 + $0x240] sm:$0xff]
    %v641 = vld [vmem:[%s2 + $0x248] sm:$0xff]
    %v642 = vld [vmem:[%s2 + $0x250] sm:$0xff]
    %v643 = vld [vmem:[%s2 + $0x258] sm:$0xff]
    %v644 = vld [vmem:[%s2 + $0x260] sm:$0xff]
    %v645 = vld [vmem:[%s2 + $0x268] sm:$0xff]
    %v646 = vld [vmem:[%s2 + $0x270] sm:$0xff]
    %v647 = vld [vmem:[%s2 + $0x278] sm:$0xff]
    %v648 = vld [vmem:[%s2 + $0x280] sm:$0xff]
    %v649 = vld [vmem:[%s2 + $0x288] sm:$0xff]
    %v650 = vld [vmem:[%s2 + $0x290] sm:$0xff]
    %v651 = vld [vmem:[%s2 + $0x298] sm:$0xff]
    %v652 = vld [vmem:[%s2 + $0x2a0] sm:$0xff]
    %v653 = vld [vmem:[%s2 + $0x2a8] sm:$0xff]
    %v654 = vld [vmem:[%s2 + $0x2b0] sm:$0xff]
    %v655 = vld [vmem:[%s2 + $0x2b8] sm:$0xff]
    %v656 = vld [vmem:[%s2 + $0x2c0] sm:$0xff]
    %v657 = vld [vmem:[%s2 + $0x2c8] sm:$0xff]
    %v658 = vld [vmem:[%s2 + $0x2d0] sm:$0xff]
    %v659 = vld [vmem:[%s2 + $0x2d8] sm:$0xff]
    %v660 = vld [vmem:[%s2 + $0x2e0] sm:$0xff]
    %v661 = vld [vmem:[%s2 + $0x2e8] sm:$0xff]
    %v662 = vld [vmem:[%s2 + $0x2f0] sm:$0xff]
    %v663 = vld [vmem:[%s2 + $0x2f8] sm:$0xff]
    %v664 = vld [vmem:[%s2 + $0x300] sm:$0xff]
    %v665 = vld [vmem:[%s2 + $0x308] sm:$0xff]
    %v666 = vld [vmem:[%s2 + $0x310] sm:$0xff]
    %v667 = vld [vmem:[%s2 + $0x318] sm:$0xff]
    %v668 = vld [vmem:[%s2 + $0x320] sm:$0xff]
    %v669 = vld [vmem:[%s2 + $0x328] sm:$0xff]
    %v670 = vld [vmem:[%s2 + $0x330] sm:$0xff]
    %v671 = vld [vmem:[%s2 + $0x338] sm:$0xff]
    %v672 = vld [vmem:[%s2 + $0x340] sm:$0xff]
    %v673 = vld [vmem:[%s2 + $0x348] sm:$0xff]
    %v674 = vld [vmem:[%s2 + $0x350] sm:$0xff]
    %v675 = vld [vmem:[%s2 + $0x358] sm:$0xff]
    %v676 = vld [vmem:[%s2 + $0x360] sm:$0xff]
    %v677 = vld [vmem:[%s2 + $0x368] sm:$0xff]
    %v678 = vld [vmem:[%s2 + $0x370] sm:$0xff]
    %v679 = vld [vmem:[%s2 + $0x378] sm:$0xff]
    %v680 = vld [vmem:[%s2 + $0x380] sm:$0xff]
    %v681 = vld [vmem:[%s2 + $0x388] sm:$0xff]
    %v682 = vld [vmem:[%s2 + $0x390] sm:$0xff]
    %v683 = vld [vmem:[%s2 + $0x398] sm:$0xff]
    %v684 = vld [vmem:[%s2 + $0x3a0] sm:$0xff]
    %v685 = vld [vmem:[%s2 + $0x3a8] sm:$0xff]
    %v686 = vld [vmem:[%s2 + $0x3b0] sm:$0xff]
    %v687 = vld [vmem:[%s2 + $0x3b8] sm:$0xff]
    %v688 = vld [vmem:[%s2 + $0x3c0] sm:$0xff]
    %v689 = vld [vmem:[%s2 + $0x3c8] sm:$0xff]
    %v690 = vld [vmem:[%s2 + $0x3d0] sm:$0xff]
    %v691 = vld [vmem:[%s2 + $0x3d8] sm:$0xff]
    %v692 = vld [vmem:[%s2 + $0x3e0] sm:$0xff]
    %v693 = vld [vmem:[%s2 + $0x3e8] sm:$0xff]
    %v694 = vld [vmem:[%s2 + $0x3f0] sm:$0xff]
    %v695 = vld [vmem:[%s2 + $0x3f8] sm:$0xff]
    %696 = vxpose.xlu0.b32.start [1/16] %v440, 128
    %697 = vxpose.xlu0.b32.cont [2/16] %v441, 128
    %698 = vxpose.xlu0.b32.cont [3/16] %v442, 128
    %699 = vxpose.xlu0.b32.cont [4/16] %v443, 128
    %700 = vxpose.xlu0.b32.cont [5/16] %v444, 128
    %701 = vxpose.xlu0.b32.cont [6/16] %v445, 128
    %702 = vxpose.xlu0.b32.cont [7/16] %v446, 128
    %703 = vxpose.xlu0.b32.cont [8/16] %v447, 128
    %704 = vxpose.xlu0.b32.cont [9/16] %v448, 128
    %705 = vxpose.xlu0.b32.cont [10/16] %v449, 128
    %706 = vxpose.xlu0.b32.cont [11/16] %v450, 128
    %707 = vxpose.xlu0.b32.cont [12/16] %v451, 128
    %708 = vxpose.xlu0.b32.cont [13/16] %v452, 128
    %709 = vxpose.xlu0.b32.cont [14/16] %v453, 128
    %710 = vxpose.xlu0.b32.cont [15/16] %v454, 128
    %711 = vxpose.xlu0.b32.end [16/16] %v455, 128
    %v712 = vpop.trf.xlu0
    %v713 = vpop.trf.xlu0
    %v714 = vpop.trf.xlu0
    %v715 = vpop.trf.xlu0
    %v716 = vpop.trf.xlu0
    %v717 = vpop.trf.xlu0
    %v718 = vpop.trf.xlu0
    %v719 = vpop.trf.xlu0
    %v720 = vpop.trf.xlu0
    %v721 = vpop.trf.xlu0
    %v722 = vpop.trf.xlu0
    %v723 = vpop.trf.xlu0
    %v724 = vpop.trf.xlu0
    %v725 = vpop.trf.xlu0
    %v726 = vpop.trf.xlu0
    %v727 = vpop.trf.xlu0
    %728 = vxpose.xlu0.b32.start [1/16] %v456, 128
    %729 = vxpose.xlu0.b32.cont [2/16] %v457, 128
    %730 = vxpose.xlu0.b32.cont [3/16] %v458, 128
    %731 = vxpose.xlu0.b32.cont [4/16] %v459, 128
    %732 = vxpose.xlu0.b32.cont [5/16] %v460, 128
    %733 = vxpose.xlu0.b32.cont [6/16] %v461, 128
    %734 = vxpose.xlu0.b32.cont [7/16] %v462, 128
    %735 = vxpose.xlu0.b32.cont [8/16] %v463, 128
    %736 = vxpose.xlu0.b32.cont [9/16] %v464, 128
    %737 = vxpose.xlu0.b32.cont [10/16] %v465, 128
    %738 = vxpose.xlu0.b32.cont [11/16] %v466, 128
    %739 = vxpose.xlu0.b32.cont [12/16] %v467, 128
    %740 = vxpose.xlu0.b32.cont [13/16] %v468, 128
    %741 = vxpose.xlu0.b32.cont [14/16] %v469, 128
    %742 = vxpose.xlu0.b32.cont [15/16] %v470, 128
    %743 = vxpose.xlu0.b32.end [16/16] %v471, 128
    %v744 = vpop.trf.xlu0
    %v745 = vpop.trf.xlu0
    %v746 = vpop.trf.xlu0
    %v747 = vpop.trf.xlu0
    %v748 = vpop.trf.xlu0
    %v749 = vpop.trf.xlu0
    %v750 = vpop.trf.xlu0
    %v751 = vpop.trf.xlu0
    %v752 = vpop.trf.xlu0
    %v753 = vpop.trf.xlu0
    %v754 = vpop.trf.xlu0
    %v755 = vpop.trf.xlu0
    %v756 = vpop.trf.xlu0
    %v757 = vpop.trf.xlu0
    %v758 = vpop.trf.xlu0
    %v759 = vpop.trf.xlu0
    %760 = vxpose.xlu0.b32.start [1/16] %v472, 128
    %761 = vxpose.xlu0.b32.cont [2/16] %v473, 128
    %762 = vxpose.xlu0.b32.cont [3/16] %v474, 128
    %763 = vxpose.xlu0.b32.cont [4/16] %v475, 128
    %764 = vxpose.xlu0.b32.cont [5/16] %v476, 128
    %765 = vxpose.xlu0.b32.cont [6/16] %v477, 128
    %766 = vxpose.xlu0.b32.cont [7/16] %v478, 128
    %767 = vxpose.xlu0.b32.cont [8/16] %v479, 128
    %768 = vxpose.xlu0.b32.cont [9/16] %v480, 128
    %769 = vxpose.xlu0.b32.cont [10/16] %v481, 128
    %770 = vxpose.xlu0.b32.cont [11/16] %v482, 128
    %771 = vxpose.xlu0.b32.cont [12/16] %v483, 128
    %772 = vxpose.xlu0.b32.cont [13/16] %v484, 128
    %773 = vxpose.xlu0.b32.cont [14/16] %v485, 128
    %774 = vxpose.xlu0.b32.cont [15/16] %v486, 128
    %775 = vxpose.xlu0.b32.end [16/16] %v487, 128
    %v776 = vpop.trf.xlu0
    %v777 = vpop.trf.xlu0
    %v778 = vpop.trf.xlu0
    %v779 = vpop.trf.xlu0
    %v780 = vpop.trf.xlu0
    %v781 = vpop.trf.xlu0
    %v782 = vpop.trf.xlu0
    %v783 = vpop.trf.xlu0
    %v784 = vpop.trf.xlu0
    %v785 = vpop.trf.xlu0
    %v786 = vpop.trf.xlu0
    %v787 = vpop.trf.xlu0
    %v788 = vpop.trf.xlu0
    %v789 = vpop.trf.xlu0
    %v790 = vpop.trf.xlu0
    %v791 = vpop.trf.xlu0
    %792 = vxpose.xlu0.b32.start [1/16] %v488, 128
    %793 = vxpose.xlu0.b32.cont [2/16] %v489, 128
    %794 = vxpose.xlu0.b32.cont [3/16] %v490, 128
    %795 = vxpose.xlu0.b32.cont [4/16] %v491, 128
    %796 = vxpose.xlu0.b32.cont [5/16] %v492, 128
    %797 = vxpose.xlu0.b32.cont [6/16] %v493, 128
    %798 = vxpose.xlu0.b32.cont [7/16] %v494, 128
    %799 = vxpose.xlu0.b32.cont [8/16] %v495, 128
    %800 = vxpose.xlu0.b32.cont [9/16] %v496, 128
    %801 = vxpose.xlu0.b32.cont [10/16] %v497, 128
    %802 = vxpose.xlu0.b32.cont [11/16] %v498, 128
    %803 = vxpose.xlu0.b32.cont [12/16] %v499, 128
    %804 = vxpose.xlu0.b32.cont [13/16] %v500, 128
    %805 = vxpose.xlu0.b32.cont [14/16] %v501, 128
    %806 = vxpose.xlu0.b32.cont [15/16] %v502, 128
    %807 = vxpose.xlu0.b32.end [16/16] %v503, 128
    %v808 = vpop.trf.xlu0
    %v809 = vpop.trf.xlu0
    %v810 = vpop.trf.xlu0
    %v811 = vpop.trf.xlu0
    %v812 = vpop.trf.xlu0
    %v813 = vpop.trf.xlu0
    %v814 = vpop.trf.xlu0
    %v815 = vpop.trf.xlu0
    %v816 = vpop.trf.xlu0
    %v817 = vpop.trf.xlu0
    %v818 = vpop.trf.xlu0
    %v819 = vpop.trf.xlu0
    %v820 = vpop.trf.xlu0
    %v821 = vpop.trf.xlu0
    %v822 = vpop.trf.xlu0
    %v823 = vpop.trf.xlu0
    %824 = vxpose.xlu0.b32.start [1/16] %v504, 128
    %825 = vxpose.xlu0.b32.cont [2/16] %v505, 128
    %826 = vxpose.xlu0.b32.cont [3/16] %v506, 128
    %827 = vxpose.xlu0.b32.cont [4/16] %v507, 128
    %828 = vxpose.xlu0.b32.cont [5/16] %v508, 128
    %829 = vxpose.xlu0.b32.cont [6/16] %v509, 128
    %830 = vxpose.xlu0.b32.cont [7/16] %v510, 128
    %831 = vxpose.xlu0.b32.cont [8/16] %v511, 128
    %832 = vxpose.xlu0.b32.cont [9/16] %v512, 128
    %833 = vxpose.xlu0.b32.cont [10/16] %v513, 128
    %834 = vxpose.xlu0.b32.cont [11/16] %v514, 128
    %835 = vxpose.xlu0.b32.cont [12/16] %v515, 128
    %836 = vxpose.xlu0.b32.cont [13/16] %v516, 128
    %837 = vxpose.xlu0.b32.cont [14/16] %v517, 128
    %838 = vxpose.xlu0.b32.cont [15/16] %v518, 128
    %839 = vxpose.xlu0.b32.end [16/16] %v519, 128
    %v840 = vpop.trf.xlu0
    %v841 = vpop.trf.xlu0
    %v842 = vpop.trf.xlu0
    %v843 = vpop.trf.xlu0
    %v844 = vpop.trf.xlu0
    %v845 = vpop.trf.xlu0
    %v846 = vpop.trf.xlu0
    %v847 = vpop.trf.xlu0
    %v848 = vpop.trf.xlu0
    %v849 = vpop.trf.xlu0
    %v850 = vpop.trf.xlu0
    %v851 = vpop.trf.xlu0
    %v852 = vpop.trf.xlu0
    %v853 = vpop.trf.xlu0
    %v854 = vpop.trf.xlu0
    %v855 = vpop.trf.xlu0
    %856 = vxpose.xlu0.b32.start [1/16] %v520, 128
    %857 = vxpose.xlu0.b32.cont [2/16] %v521, 128
    %858 = vxpose.xlu0.b32.cont [3/16] %v522, 128
    %859 = vxpose.xlu0.b32.cont [4/16] %v523, 128
    %860 = vxpose.xlu0.b32.cont [5/16] %v524, 128
    %861 = vxpose.xlu0.b32.cont [6/16] %v525, 128
    %862 = vxpose.xlu0.b32.cont [7/16] %v526, 128
    %863 = vxpose.xlu0.b32.cont [8/16] %v527, 128
    %864 = vxpose.xlu0.b32.cont [9/16] %v528, 128
    %865 = vxpose.xlu0.b32.cont [10/16] %v529, 128
    %866 = vxpose.xlu0.b32.cont [11/16] %v530, 128
    %867 = vxpose.xlu0.b32.cont [12/16] %v531, 128
    %868 = vxpose.xlu0.b32.cont [13/16] %v532, 128
    %869 = vxpose.xlu0.b32.cont [14/16] %v533, 128
    %870 = vxpose.xlu0.b32.cont [15/16] %v534, 128
    %871 = vxpose.xlu0.b32.end [16/16] %v535, 128
    %v872 = vpop.trf.xlu0
    %v873 = vpop.trf.xlu0
    %v874 = vpop.trf.xlu0
    %v875 = vpop.trf.xlu0
    %v876 = vpop.trf.xlu0
    %v877 = vpop.trf.xlu0
    %v878 = vpop.trf.xlu0
    %v879 = vpop.trf.xlu0
    %v880 = vpop.trf.xlu0
    %v881 = vpop.trf.xlu0
    %v882 = vpop.trf.xlu0
    %v883 = vpop.trf.xlu0
    %v884 = vpop.trf.xlu0
    %v885 = vpop.trf.xlu0
    %v886 = vpop.trf.xlu0
    %v887 = vpop.trf.xlu0
    %888 = vxpose.xlu0.b32.start [1/16] %v536, 128
    %889 = vxpose.xlu0.b32.cont [2/16] %v537, 128
    %890 = vxpose.xlu0.b32.cont [3/16] %v538, 128
    %891 = vxpose.xlu0.b32.cont [4/16] %v539, 128
    %892 = vxpose.xlu0.b32.cont [5/16] %v540, 128
    %893 = vxpose.xlu0.b32.cont [6/16] %v541, 128
    %894 = vxpose.xlu0.b32.cont [7/16] %v542, 128
    %895 = vxpose.xlu0.b32.cont [8/16] %v543, 128
    %896 = vxpose.xlu0.b32.cont [9/16] %v544, 128
    %897 = vxpose.xlu0.b32.cont [10/16] %v545, 128
    %898 = vxpose.xlu0.b32.cont [11/16] %v546, 128
    %899 = vxpose.xlu0.b32.cont [12/16] %v547, 128
    %900 = vxpose.xlu0.b32.cont [13/16] %v548, 128
    %901 = vxpose.xlu0.b32.cont [14/16] %v549, 128
    %902 = vxpose.xlu0.b32.cont [15/16] %v550, 128
    %903 = vxpose.xlu0.b32.end [16/16] %v551, 128
    %v904 = vpop.trf.xlu0
    %v905 = vpop.trf.xlu0
    %v906 = vpop.trf.xlu0
    %v907 = vpop.trf.xlu0
    %v908 = vpop.trf.xlu0
    %v909 = vpop.trf.xlu0
    %v910 = vpop.trf.xlu0
    %v911 = vpop.trf.xlu0
    %v912 = vpop.trf.xlu0
    %v913 = vpop.trf.xlu0
    %v914 = vpop.trf.xlu0
    %v915 = vpop.trf.xlu0
    %v916 = vpop.trf.xlu0
    %v917 = vpop.trf.xlu0
    %v918 = vpop.trf.xlu0
    %v919 = vpop.trf.xlu0
    %920 = vxpose.xlu0.b32.start [1/16] %v552, 128
    %921 = vxpose.xlu0.b32.cont [2/16] %v553, 128
    %922 = vxpose.xlu0.b32.cont [3/16] %v554, 128
    %923 = vxpose.xlu0.b32.cont [4/16] %v555, 128
    %924 = vxpose.xlu0.b32.cont [5/16] %v556, 128
    %925 = vxpose.xlu0.b32.cont [6/16] %v557, 128
    %926 = vxpose.xlu0.b32.cont [7/16] %v558, 128
    %927 = vxpose.xlu0.b32.cont [8/16] %v559, 128
    %928 = vxpose.xlu0.b32.cont [9/16] %v560, 128
    %929 = vxpose.xlu0.b32.cont [10/16] %v561, 128
    %930 = vxpose.xlu0.b32.cont [11/16] %v562, 128
    %931 = vxpose.xlu0.b32.cont [12/16] %v563, 128
    %932 = vxpose.xlu0.b32.cont [13/16] %v564, 128
    %933 = vxpose.xlu0.b32.cont [14/16] %v565, 128
    %934 = vxpose.xlu0.b32.cont [15/16] %v566, 128
    %935 = vxpose.xlu0.b32.end [16/16] %v567, 128
    %v936 = vpop.trf.xlu0
    %v937 = vpop.trf.xlu0
    %v938 = vpop.trf.xlu0
    %v939 = vpop.trf.xlu0
    %v940 = vpop.trf.xlu0
    %v941 = vpop.trf.xlu0
    %v942 = vpop.trf.xlu0
    %v943 = vpop.trf.xlu0
    %v944 = vpop.trf.xlu0
    %v945 = vpop.trf.xlu0
    %v946 = vpop.trf.xlu0
    %v947 = vpop.trf.xlu0
    %v948 = vpop.trf.xlu0
    %v949 = vpop.trf.xlu0
    %v950 = vpop.trf.xlu0
    %v951 = vpop.trf.xlu0
    %952 = vmatprep.subr.mxu0 0.0
    %953 = vmatpush1.msra.mxu0 %v583
    %954 = vmatprep.subr.mxu0 0.0
    %955 = vmatpush1.msra.mxu0 %v582
    %956 = vmatprep.subr.mxu0 0.0
    %957 = vmatpush1.msra.mxu0 %v581
    %958 = vmatprep.subr.mxu0 0.0
    %959 = vmatpush1.msra.mxu0 %v580
    %960 = vmatprep.subr.mxu0 0.0
    %961 = vmatpush1.msra.mxu0 %v579
    %962 = vmatprep.subr.mxu0 0.0
    %963 = vmatpush1.msra.mxu0 %v578
    %964 = vmatprep.subr.mxu0 0.0
    %965 = vmatpush1.msra.mxu0 %v577
    %966 = vmatprep.subr.mxu0 0.0
    %967 = vmatpush1.msra.mxu0 %v576
    %968 = vmatprep.subr.mxu0 0.0
    %969 = vmatpush1.msra.mxu0 %v575
    %970 = vmatprep.subr.mxu0 0.0
    %971 = vmatpush1.msra.mxu0 %v574
    %972 = vmatprep.subr.mxu0 0.0
    %973 = vmatpush1.msra.mxu0 %v573
    %974 = vmatprep.subr.mxu0 0.0
    %975 = vmatpush1.msra.mxu0 %v572
    %976 = vmatprep.subr.mxu0 0.0
    %977 = vmatpush1.msra.mxu0 %v571
    %978 = vmatprep.subr.mxu0 0.0
    %979 = vmatpush1.msra.mxu0 %v570
    %980 = vmatprep.subr.mxu0 0.0
    %981 = vmatpush1.msra.mxu0 %v569
    %982 = vmatprep.subr.mxu0 0.0
    %983 = vmatpush1.msra.mxu0 %v568
    %984 = vmatprep.subr.mxu0 0.0
    %985 = vmatpush2.msra.mxu0 %v599
    %986 = vmatprep.subr.mxu0 0.0
    %987 = vmatpush2.msra.mxu0 %v598
    %988 = vmatprep.subr.mxu0 0.0
    %989 = vmatpush2.msra.mxu0 %v597
    %990 = vmatprep.subr.mxu0 0.0
    %991 = vmatpush2.msra.mxu0 %v596
    %992 = vmatprep.subr.mxu0 0.0
    %993 = vmatpush2.msra.mxu0 %v595
    %994 = vmatprep.subr.mxu0 0.0
    %995 = vmatpush2.msra.mxu0 %v594
    %996 = vmatprep.subr.mxu0 0.0
    %997 = vmatpush2.msra.mxu0 %v593
    %998 = vmatprep.subr.mxu0 0.0
    %999 = vmatpush2.msra.mxu0 %v592
    %1000 = vmatprep.subr.mxu0 0.0
    %1001 = vmatpush2.msra.mxu0 %v591
    %1002 = vmatprep.subr.mxu0 0.0
    %1003 = vmatpush2.msra.mxu0 %v590
    %1004 = vmatprep.subr.mxu0 0.0
    %1005 = vmatpush2.msra.mxu0 %v589
    %1006 = vmatprep.subr.mxu0 0.0
    %1007 = vmatpush2.msra.mxu0 %v588
    %1008 = vmatprep.subr.mxu0 0.0
    %1009 = vmatpush2.msra.mxu0 %v587
    %1010 = vmatprep.subr.mxu0 0.0
    %1011 = vmatpush2.msra.mxu0 %v586
    %1012 = vmatprep.subr.mxu0 0.0
    %1013 = vmatpush2.msra.mxu0 %v585
    %1014 = vmatprep.subr.mxu0 0.0
    %1015 = vmatpush2.msra.mxu0 %v584
    %1016 = vmatprep.mubr.f32.mxu0 %v744
    %1017 = vmatmul.mubr.f32.gmra.mxu0 %v712
    %v1018 = vpop.f32.mrf.mxu0
    %v1019 = vadd.f32 0.0, %v1018
    %v1020 = vpop.f32.mrf.mxu0
    %1021 = vdwg.mxu0
    %1022 = vmatprep.subr.mxu0 0.0
    %1023 = vmatpush1.msra.mxu0 %v615
    %1024 = vmatprep.subr.mxu0 0.0
    %1025 = vmatpush1.msra.mxu0 %v614
    %1026 = vmatprep.subr.mxu0 0.0
    %1027 = vmatpush1.msra.mxu0 %v613
    %1028 = vmatprep.subr.mxu0 0.0
    %1029 = vmatpush1.msra.mxu0 %v612
    %1030 = vmatprep.subr.mxu0 0.0
    %1031 = vmatpush1.msra.mxu0 %v611
    %1032 = vmatprep.subr.mxu0 0.0
    %1033 = vmatpush1.msra.mxu0 %v610
    %1034 = vmatprep.subr.mxu0 0.0
    %1035 = vmatpush1.msra.mxu0 %v609
    %1036 = vmatprep.subr.mxu0 0.0
    %1037 = vmatpush1.msra.mxu0 %v608
    %1038 = vmatprep.subr.mxu0 0.0
    %1039 = vmatpush1.msra.mxu0 %v607
    %1040 = vmatprep.subr.mxu0 0.0
    %1041 = vmatpush1.msra.mxu0 %v606
    %1042 = vmatprep.subr.mxu0 0.0
    %1043 = vmatpush1.msra.mxu0 %v605
    %1044 = vmatprep.subr.mxu0 0.0
    %1045 = vmatpush1.msra.mxu0 %v604
    %1046 = vmatprep.subr.mxu0 0.0
    %1047 = vmatpush1.msra.mxu0 %v603
    %1048 = vmatprep.subr.mxu0 0.0
    %1049 = vmatpush1.msra.mxu0 %v602
    %1050 = vmatprep.subr.mxu0 0.0
    %1051 = vmatpush1.msra.mxu0 %v601
    %1052 = vmatprep.subr.mxu0 0.0
    %1053 = vmatpush1.msra.mxu0 %v600
    %1054 = vmatprep.subr.mxu0 0.0
    %1055 = vmatpush2.msra.mxu0 %v631
    %1056 = vmatprep.subr.mxu0 0.0
    %1057 = vmatpush2.msra.mxu0 %v630
    %1058 = vmatprep.subr.mxu0 0.0
    %1059 = vmatpush2.msra.mxu0 %v629
    %1060 = vmatprep.subr.mxu0 0.0
    %1061 = vmatpush2.msra.mxu0 %v628
    %1062 = vmatprep.subr.mxu0 0.0
    %1063 = vmatpush2.msra.mxu0 %v627
    %1064 = vmatprep.subr.mxu0 0.0
    %1065 = vmatpush2.msra.mxu0 %v626
    %1066 = vmatprep.subr.mxu0 0.0
    %1067 = vmatpush2.msra.mxu0 %v625
    %1068 = vmatprep.subr.mxu0 0.0
    %1069 = vmatpush2.msra.mxu0 %v624
    %1070 = vmatprep.subr.mxu0 0.0
    %1071 = vmatpush2.msra.mxu0 %v623
    %1072 = vmatprep.subr.mxu0 0.0
    %1073 = vmatpush2.msra.mxu0 %v622
    %1074 = vmatprep.subr.mxu0 0.0
    %1075 = vmatpush2.msra.mxu0 %v621
    %1076 = vmatprep.subr.mxu0 0.0
    %1077 = vmatpush2.msra.mxu0 %v620
    %1078 = vmatprep.subr.mxu0 0.0
    %1079 = vmatpush2.msra.mxu0 %v619
    %1080 = vmatprep.subr.mxu0 0.0
    %1081 = vmatpush2.msra.mxu0 %v618
    %1082 = vmatprep.subr.mxu0 0.0
    %1083 = vmatpush2.msra.mxu0 %v617
    %1084 = vmatprep.subr.mxu0 0.0
    %1085 = vmatpush2.msra.mxu0 %v616
    %1086 = vmatprep.mubr.f32.mxu0 %v808
    %1087 = vmatmul.mubr.f32.gmra.mxu0 %v776
    %v1088 = vpop.f32.mrf.mxu0
    %v1089 = vadd.f32 %v1019, %v1088
    %v1090 = vpop.f32.mrf.mxu0
    %1091 = vdwg.mxu0
    %1092 = vmatprep.subr.mxu0 0.0
    %1093 = vmatpush1.msra.mxu0 %v647
    %1094 = vmatprep.subr.mxu0 0.0
    %1095 = vmatpush1.msra.mxu0 %v646
    %1096 = vmatprep.subr.mxu0 0.0
    %1097 = vmatpush1.msra.mxu0 %v645
    %1098 = vmatprep.subr.mxu0 0.0
    %1099 = vmatpush1.msra.mxu0 %v644
    %1100 = vmatprep.subr.mxu0 0.0
    %1101 = vmatpush1.msra.mxu0 %v643
    %1102 = vmatprep.subr.mxu0 0.0
    %1103 = vmatpush1.msra.mxu0 %v642
    %1104 = vmatprep.subr.mxu0 0.0
    %1105 = vmatpush1.msra.mxu0 %v641
    %1106 = vmatprep.subr.mxu0 0.0
    %1107 = vmatpush1.msra.mxu0 %v640
    %1108 = vmatprep.subr.mxu0 0.0
    %1109 = vmatpush1.msra.mxu0 %v639
    %1110 = vmatprep.subr.mxu0 0.0
    %1111 = vmatpush1.msra.mxu0 %v638
    %1112 = vmatprep.subr.mxu0 0.0
    %1113 = vmatpush1.msra.mxu0 %v637
    %1114 = vmatprep.subr.mxu0 0.0
    %1115 = vmatpush1.msra.mxu0 %v636
    %1116 = vmatprep.subr.mxu0 0.0
    %1117 = vmatpush1.msra.mxu0 %v635
    %1118 = vmatprep.subr.mxu0 0.0
    %1119 = vmatpush1.msra.mxu0 %v634
    %1120 = vmatprep.subr.mxu0 0.0
    %1121 = vmatpush1.msra.mxu0 %v633
    %1122 = vmatprep.subr.mxu0 0.0
    %1123 = vmatpush1.msra.mxu0 %v632
    %1124 = vmatprep.subr.mxu0 0.0
    %1125 = vmatpush2.msra.mxu0 %v663
    %1126 = vmatprep.subr.mxu0 0.0
    %1127 = vmatpush2.msra.mxu0 %v662
    %1128 = vmatprep.subr.mxu0 0.0
    %1129 = vmatpush2.msra.mxu0 %v661
    %1130 = vmatprep.subr.mxu0 0.0
    %1131 = vmatpush2.msra.mxu0 %v660
    %1132 = vmatprep.subr.mxu0 0.0
    %1133 = vmatpush2.msra.mxu0 %v659
    %1134 = vmatprep.subr.mxu0 0.0
    %1135 = vmatpush2.msra.mxu0 %v658
    %1136 = vmatprep.subr.mxu0 0.0
    %1137 = vmatpush2.msra.mxu0 %v657
    %1138 = vmatprep.subr.mxu0 0.0
    %1139 = vmatpush2.msra.mxu0 %v656
    %1140 = vmatprep.subr.mxu0 0.0
    %1141 = vmatpush2.msra.mxu0 %v655
    %1142 = vmatprep.subr.mxu0 0.0
    %1143 = vmatpush2.msra.mxu0 %v654
    %1144 = vmatprep.subr.mxu0 0.0
    %1145 = vmatpush2.msra.mxu0 %v653
    %1146 = vmatprep.subr.mxu0 0.0
    %1147 = vmatpush2.msra.mxu0 %v652
    %1148 = vmatprep.subr.mxu0 0.0
    %1149 = vmatpush2.msra.mxu0 %v651
    %1150 = vmatprep.subr.mxu0 0.0
    %1151 = vmatpush2.msra.mxu0 %v650
    %1152 = vmatprep.subr.mxu0 0.0
    %1153 = vmatpush2.msra.mxu0 %v649
    %1154 = vmatprep.subr.mxu0 0.0
    %1155 = vmatpush2.msra.mxu0 %v648
    %1156 = vmatprep.mubr.f32.mxu0 %v872
    %1157 = vmatmul.mubr.f32.gmra.mxu0 %v840
    %v1158 = vpop.f32.mrf.mxu0
    %v1159 = vadd.f32 %v1089, %v1158
    %v1160 = vpop.f32.mrf.mxu0
    %1161 = vdwg.mxu0
    %1162 = vmatprep.subr.mxu0 0.0
    %1163 = vmatpush1.msra.mxu0 %v679
    %1164 = vmatprep.subr.mxu0 0.0
    %1165 = vmatpush1.msra.mxu0 %v678
    %1166 = vmatprep.subr.mxu0 0.0
    %1167 = vmatpush1.msra.mxu0 %v677
    %1168 = vmatprep.subr.mxu0 0.0
    %1169 = vmatpush1.msra.mxu0 %v676
    %1170 = vmatprep.subr.mxu0 0.0
    %1171 = vmatpush1.msra.mxu0 %v675
    %1172 = vmatprep.subr.mxu0 0.0
    %1173 = vmatpush1.msra.mxu0 %v674
    %1174 = vmatprep.subr.mxu0 0.0
    %1175 = vmatpush1.msra.mxu0 %v673
    %1176 = vmatprep.subr.mxu0 0.0
    %1177 = vmatpush1.msra.mxu0 %v672
    %1178 = vmatprep.subr.mxu0 0.0
    %1179 = vmatpush1.msra.mxu0 %v671
    %1180 = vmatprep.subr.mxu0 0.0
    %1181 = vmatpush1.msra.mxu0 %v670
    %1182 = vmatprep.subr.mxu0 0.0
    %1183 = vmatpush1.msra.mxu0 %v669
    %1184 = vmatprep.subr.mxu0 0.0
    %1185 = vmatpush1.msra.mxu0 %v668
    %1186 = vmatprep.subr.mxu0 0.0
    %1187 = vmatpush1.msra.mxu0 %v667
    %1188 = vmatprep.subr.mxu0 0.0
    %1189 = vmatpush1.msra.mxu0 %v666
    %1190 = vmatprep.subr.mxu0 0.0
    %1191 = vmatpush1.msra.mxu0 %v665
    %1192 = vmatprep.subr.mxu0 0.0
    %1193 = vmatpush1.msra.mxu0 %v664
    %1194 = vmatprep.subr.mxu0 0.0
    %1195 = vmatpush2.msra.mxu0 %v695
    %1196 = vmatprep.subr.mxu0 0.0
    %1197 = vmatpush2.msra.mxu0 %v694
    %1198 = vmatprep.subr.mxu0 0.0
    %1199 = vmatpush2.msra.mxu0 %v693
    %1200 = vmatprep.subr.mxu0 0.0
    %1201 = vmatpush2.msra.mxu0 %v692
    %1202 = vmatprep.subr.mxu0 0.0
    %1203 = vmatpush2.msra.mxu0 %v691
    %1204 = vmatprep.subr.mxu0 0.0
    %1205 = vmatpush2.msra.mxu0 %v690
    %1206 = vmatprep.subr.mxu0 0.0
    %1207 = vmatpush2.msra.mxu0 %v689
    %1208 = vmatprep.subr.mxu0 0.0
    %1209 = vmatpush2.msra.mxu0 %v688
    %1210 = vmatprep.subr.mxu0 0.0
    %1211 = vmatpush2.msra.mxu0 %v687
    %1212 = vmatprep.subr.mxu0 0.0
    %1213 = vmatpush2.msra.mxu0 %v686
    %1214 = vmatprep.subr.mxu0 0.0
    %1215 = vmatpush2.msra.mxu0 %v685
    %1216 = vmatprep.subr.mxu0 0.0
    %1217 = vmatpush2.msra.mxu0 %v684
    %1218 = vmatprep.subr.mxu0 0.0
    %1219 = vmatpush2.msra.mxu0 %v683
    %1220 = vmatprep.subr.mxu0 0.0
    %1221 = vmatpush2.msra.mxu0 %v682
    %1222 = vmatprep.subr.mxu0 0.0
    %1223 = vmatpush2.msra.mxu0 %v681
    %1224 = vmatprep.subr.mxu0 0.0
    %1225 = vmatpush2.msra.mxu0 %v680
    %1226 = vmatprep.mubr.f32.mxu0 %v936
    %1227 = vmatmul.mubr.f32.gmra.mxu0 %v904
    %v1228 = vpop.f32.mrf.mxu0
    %v1229 = vadd.f32 %v1159, %v1228
    %v1230 = vpop.f32.mrf.mxu0
    %1231 = vdwg.mxu0
    %1232 = vst [vmem:[#allocation2] sm:$0xff] %v1229
    // Predicated region
    $region14: #{tpu_custom_call.1} parent=1 // pred_check
      _
    $region15: #{tpu_custom_call.1} parent=1 // pred_check_branch
      %1234 = sbr.rel (0) target = $region17
    $region16: #{tpu_custom_call.1} parent=1 // pred_region
      %s1236 = ssub.s32 128, 128
      %1237 = vsyncadd [#allocation3], %s1236
      %s1239 = sshll.u32 [#allocation2], 4
      %s1240 = int_to_ptr.vmem [resolvable:$true] %s1239
      %1242 = dma.vmem_to_hbm [thread:$0]  %s1240, 128, %s3, [#allocation3]
    $region17: #{tpu_custom_call.1} parent=1 // pred_fallthru
      _
    // Predicated region
    $region18: #{tpu_custom_call.1} parent=1 // pred_check
      _
    $region19: #{tpu_custom_call.1} parent=1 // pred_check_branch
      %1244 = sbr.rel (0) target = $region21
    $region20: #{tpu_custom_call.1} parent=1 // pred_region
      %1245 = dma.done [#allocation3], 128
    $region21: #{tpu_custom_call.1} parent=1 // pred_fallthru
      _
    %1246 = vsyncpa [#allocation3], 1

</llo_original>
